<compile_context>
chip_gen: v6e
topology: v6e:2x2x1
jax: 0.10.0
libtpu: 0.0.40
codegen_flags: <defaults>
</compile_context>

<pallas_src>
import functools

import jax
import jax.numpy as jnp
from jax import lax
from jax.experimental import pallas as pl
from jax.experimental.pallas import tpu as pltpu

LANE = 128


def _round_up(n, m):
    return ((n + m - 1) // m) * m


def _apply_activation(h, name):
    # VPU/EUP-only ops; padded lanes never leak because the padded rows/cols of
    # the NEXT layer's weights (and the output weight) are zero.
    if name == "relu":
        return jnp.maximum(h, 0.0)
    if name == "leaky":
        return jnp.where(h > 0, h, 0.01 * h)
    if name == "tanh":
        return jnp.tanh(h)
    if name == "sigmoid":
        return jax.nn.sigmoid(h)            # logistic -> EUP, no VALU divide
    if name == "elu":
        return jnp.where(h > 0, h, jnp.expm1(h))   # expm1 -> EUP
    raise ValueError(f"unsupported activation: {name}")


def fnn_kernel(*refs, num_hidden, activation, compute_dtype):
    if num_hidden > 0:
        x_ref, w1_ref, b1_ref, wh_ref, bh_ref, woT_ref, bo_ref, o_ref = refs
    else:
        x_ref, w1_ref, b1_ref, woT_ref, bo_ref, o_ref = refs
        wh_ref = bh_ref = None

    cd = compute_dtype

    # First layer: [tb, d_in] @ [d_in, H_p] (f32 MXU accumulation) + bias, act.
    h = jnp.dot(x_ref[...].astype(cd), w1_ref[...],
                preferred_element_type=jnp.float32) + b1_ref[...]
    h = _apply_activation(h, activation).astype(cd)   # carry bf16 between layers

    # Hidden layers (static unroll; num_hidden is a small compile-time const).
    for i in range(num_hidden):
        a = jnp.dot(h, wh_ref[i],
                    preferred_element_type=jnp.float32) + bh_ref[i]
        h = _apply_activation(a, activation).astype(cd)

    # Output layer as a lane-dense (1, tile_b) row:
    #   woT [1, H_p] contracted with h [tile_b, H_p] over H -> [1, tile_b].
    out = lax.dot_general(woT_ref[...], h, (((1,), (1,)), ((), ())),
                          preferred_element_type=jnp.float32)
    o_ref[...] = (out + bo_ref[...]).astype(o_ref.dtype)


def prepare_params(params, compute_dtype=jnp.bfloat16):
    """One-time pad + cast of the parameters (call once, reuse every forward).

    Zero padding keeps results identical: padded weight rows/cols and bias
    lanes are zero, so padded lanes never contribute to real outputs.
    """
    w1, b1, wh, bh, wo, bo = params
    d_in, hidden = w1.shape
    num_hidden = 0 if wh is None else int(wh.shape[0])
    h_p = _round_up(hidden, LANE)
    cd, f32 = compute_dtype, jnp.float32

    w1_p = jnp.zeros((d_in, h_p), cd).at[:, :hidden].set(w1.astype(cd))
    b1_p = jnp.zeros((1, h_p), f32).at[:, :hidden].set(
        b1.reshape(1, hidden).astype(f32))
    if num_hidden > 0:
        wh_p = jnp.zeros((num_hidden, h_p, h_p), cd).at[
            :, :hidden, :hidden].set(wh.astype(cd))
        bh_p = jnp.zeros((num_hidden, 1, h_p), f32).at[:, :, :hidden].set(
            bh.reshape(num_hidden, 1, hidden).astype(f32))
    else:
        wh_p, bh_p = None, None
    woT_p = jnp.zeros((1, h_p), cd).at[:, :hidden].set(
        wo.reshape(hidden, 1).T.astype(cd))
    bo_p = bo.reshape(1, 1).astype(f32)
    return (w1_p, b1_p, wh_p, bh_p, woT_p, bo_p)


def fnn_forward(x, padded_params, *, activation="relu", tile_b=256,
                compute_dtype=jnp.bfloat16):
    """x: [B, input_dim] float32 -> [B, 1] float32 (matches FNN.forward).

    `padded_params` must come from prepare_params() (padded + cast once)."""
    w1_p, b1_p, wh_p, bh_p, woT_p, bo_p = padded_params
    B, d_in = x.shape
    h_p = w1_p.shape[1]
    num_hidden = 0 if wh_p is None else int(wh_p.shape[0])

    # tile_b: multiple of 128 (lane-dense output row), no larger than needed.
    # v5e/v6e: prefer large tiles (few grid steps); v7x: keep grid a multiple
    # of 2 with >=2 steps/core so x-tile DMA pipelines under compute.
    tile_b = max(LANE, _round_up(min(tile_b, _round_up(B, LANE)), LANE))
    b_p = _round_up(B, tile_b)
    grid = (b_p // tile_b,)

    if b_p != B:
        # Batch-only padding (feature axis stays unpadded); padded rows compute
        # garbage that is sliced off below. Under jit this fuses with x's
        # producer.
        x = jnp.pad(x, ((0, b_p - B), (0, 0)))

    in_specs = [
        pl.BlockSpec((tile_b, d_in), lambda i: (i, 0)),      # x tile (unpadded lanes)
        pl.BlockSpec((d_in, h_p), lambda i: (0, 0)),         # W1 (resident)
        pl.BlockSpec((1, h_p), lambda i: (0, 0)),            # b1
    ]
    args = [x, w1_p, b1_p]
    if num_hidden > 0:
        in_specs += [
            pl.BlockSpec((num_hidden, h_p, h_p), lambda i: (0, 0, 0)),  # stacked Wh
            pl.BlockSpec((num_hidden, 1, h_p), lambda i: (0, 0, 0)),    # stacked bh
        ]
        args += [wh_p, bh_p]
    in_specs += [
        pl.BlockSpec((1, h_p), lambda i: (0, 0)),            # W_out^T (lane-dense)
        pl.BlockSpec((1, 1), lambda i: (0, 0)),              # b_out scalar
    ]
    args += [woT_p, bo_p]

    # VMEM budget derived from actual buffers (default 2x buffering on every
    # BlockSpec) + headroom for the in-kernel f32/bf16 activations — stays well
    # inside v7x's 64 MiB ceiling, plenty on v5e/v6e's 128 MiB.
    cd_bytes = jnp.dtype(compute_dtype).itemsize
    resident = (d_in * h_p * cd_bytes + h_p * 4
                + num_hidden * h_p * h_p * cd_bytes + num_hidden * h_p * 4
                + h_p * cd_bytes + 4)
    streamed = tile_b * d_in * 4 + tile_b * 4
    vmem_limit = 2 * (resident + streamed) + tile_b * h_p * 8 + (8 << 20)
    vmem_limit = int(min(max(vmem_limit, 16 << 20), 56 << 20))

    kernel = functools.partial(fnn_kernel, num_hidden=num_hidden,
                               activation=activation,
                               compute_dtype=compute_dtype)

    out_row = pl.pallas_call(
        kernel,
        out_shape=jax.ShapeDtypeStruct((1, b_p), jnp.float32),
        grid_spec=pltpu.PrefetchScalarGridSpec(
            num_scalar_prefetch=0,
            grid=grid,
            in_specs=in_specs,
            out_specs=pl.BlockSpec((1, tile_b), lambda i: (0, i)),
        ),
        compiler_params=pltpu.CompilerParams(
            dimension_semantics=("parallel",),
            vmem_limit_bytes=vmem_limit,
        ),
    )(*args)

    # Real result: first B lanes of the compact row, reshaped to [B, 1].
    return out_row[0, :B].reshape(B, 1)


def init_params(key, input_dim, hidden_dim, hidden_num):
    """Deterministic synthetic parameters (shapes match torch.nn.Linear),
    weights pre-transposed to [in_features, out_features]."""
    ks = jax.random.split(key, 6)
    num_hidden = max(hidden_num - 1, 0)
    w1 = jax.random.normal(ks[0], (input_dim, hidden_dim), jnp.float32) * 0.1
    b1 = jax.random.normal(ks[1], (1, hidden_dim), jnp.float32) * 0.1
    wh = jax.random.normal(ks[2], (num_hidden, hidden_dim, hidden_dim),
                           jnp.float32) * 0.1
    bh = jax.random.normal(ks[3], (num_hidden, 1, hidden_dim), jnp.float32) * 0.1
    wo = jax.random.normal(ks[4], (hidden_dim, 1), jnp.float32) * 0.1
    bo = jax.random.normal(ks[5], (1, 1), jnp.float32) * 0.1
    return (w1, b1, wh, bh, wo, bo)


def fnn_reference(x, params, compute_dtype=jnp.float32, activation="relu"):
    """Pure-JAX reference with the same matmul precision as the kernel
    (compute_dtype matmul inputs, f32 accumulation)."""
    w1, b1, wh, bh, wo, bo = params
    c = lambda a: a.astype(compute_dtype)
    h = jnp.dot(c(x), c(w1), preferred_element_type=jnp.float32) + b1
    h = _apply_activation(h, activation)
    for i in range(wh.shape[0]):
        h = jnp.dot(c(h), c(wh[i]), preferred_element_type=jnp.float32) + bh[i]
        h = _apply_activation(h, activation)
    return jnp.dot(c(h), c(wo), preferred_element_type=jnp.float32) + bo


if __name__ == "__main__":
    # Shapes consistent with FNN(input_dim=16, hidden_dim=32, hidden_num=3);
    # batch=512 with tile_b=128 -> grid=(4,): 2 steps per v7x TensorCore (lets
    # the next x tile prefetch under compute) and still trivial on v5e/v6e.
    batch, input_dim, hidden_dim, hidden_num = 512, 16, 32, 3

    key = jax.random.PRNGKey(0)
    kx, kp = jax.random.split(key)
    x = jax.random.normal(kx, (batch, input_dim), jnp.float32)
    params = init_params(kp, input_dim, hidden_dim, hidden_num)

    # Pad + cast parameters ONCE; reuse across forwards.
    padded = prepare_params(params, compute_dtype=jnp.bfloat16)

    fwd = jax.jit(functools.partial(fnn_forward, activation="relu",
                                    tile_b=128, compute_dtype=jnp.bfloat16))
    out = jax.block_until_ready(fwd(x, padded))
    assert out.shape == (batch, 1), out.shape

    # Reference with matching matmul precision (bf16 inputs, f32 accumulation).
    ref = fnn_reference(x, params, compute_dtype=jnp.bfloat16,
                        activation="relu")
    max_err = float(jnp.max(jnp.abs(out - ref)))
    assert jnp.allclose(out, ref, atol=1e-4, rtol=1e-3), \
        f"max abs err = {max_err}"

    print("KERNEL_OK")
</pallas_src>

<mosaic_0001>
module attributes {stable_mosaic.version = 11 : i64} {
  func.func @fnn_kernel(%arg0: i32, %arg1: memref<128x16xf32, #tpu.memory_space<vmem>>, %arg2: memref<16x128xbf16, #tpu.memory_space<vmem>>, %arg3: memref<1x128xf32, #tpu.memory_space<vmem>>, %arg4: memref<2x128x128xbf16, #tpu.memory_space<vmem>>, %arg5: memref<2x1x128xf32, #tpu.memory_space<vmem>>, %arg6: memref<1x128xbf16, #tpu.memory_space<vmem>>, %arg7: memref<1x1xf32, #tpu.memory_space<vmem>>, %arg8: memref<1x128xf32, #tpu.memory_space<vmem>>) attributes {dimension_semantics = [#tpu.dimension_semantics<parallel>], iteration_bounds = array<i64: 4>, scalar_prefetch = 0 : i64, scratch_operands = 0 : i64, tpu.core_type = #tpu.core_type<tc>, window_params = [{transform_indices = @transform_0, window_bounds = array<i64: 128, 16>}, {pipeline_mode = #tpu.pipeline_mode<synchronous>, transform_indices = @transform_1, window_bounds = array<i64: 16, 128>}, {pipeline_mode = #tpu.pipeline_mode<synchronous>, transform_indices = @transform_2, window_bounds = array<i64: 1, 128>}, {pipeline_mode = #tpu.pipeline_mode<synchronous>, transform_indices = @transform_3, window_bounds = array<i64: 2, 128, 128>}, {pipeline_mode = #tpu.pipeline_mode<synchronous>, transform_indices = @transform_4, window_bounds = array<i64: 2, 1, 128>}, {pipeline_mode = #tpu.pipeline_mode<synchronous>, transform_indices = @transform_5, window_bounds = array<i64: 1, 128>}, {pipeline_mode = #tpu.pipeline_mode<synchronous>, transform_indices = @transform_6, window_bounds = array<i64: 1, 1>}, {transform_indices = @transform_7, window_bounds = array<i64: 1, 128>}]} {
    %c0 = arith.constant 0 : index
    %c0_0 = arith.constant 0 : index
    %0 = vector.load %arg1[%c0, %c0_0] : memref<128x16xf32, #tpu.memory_space<vmem>>, vector<128x16xf32>
    %1 = arith.truncf %0 : vector<128x16xf32> to vector<128x16xbf16>
    %c0_1 = arith.constant 0 : index
    %c0_2 = arith.constant 0 : index
    %2 = vector.load %arg2[%c0_1, %c0_2] : memref<16x128xbf16, #tpu.memory_space<vmem>>, vector<16x128xbf16>
    %cst = arith.constant dense<0.000000e+00> : vector<128x128xf32>
    %3 = tpu.matmul %1, %2, %cst {dimension_numbers = #tpu.dot_dimension_numbers<[1], [0], [0], [1], [0, 0, 1, 1], [], []>} : vector<128x16xbf16>, vector<16x128xbf16>, vector<128x128xf32> -> vector<128x128xf32>
    %c0_3 = arith.constant 0 : index
    %c0_4 = arith.constant 0 : index
    %4 = vector.load %arg3[%c0_3, %c0_4] : memref<1x128xf32, #tpu.memory_space<vmem>>, vector<1x128xf32>
    %5 = vector.broadcast %4 : vector<1x128xf32> to vector<128x128xf32>
    %6 = arith.addf %3, %5 : vector<128x128xf32>
    %cst_5 = arith.constant 0.000000e+00 : f32
    %7 = vector.broadcast %cst_5 : f32 to vector<128x128xf32>
    %8 = arith.maximumf %6, %7 : vector<128x128xf32>
    %9 = arith.truncf %8 : vector<128x128xf32> to vector<128x128xbf16>
    %c0_6 = arith.constant 0 : index
    %c0_7 = arith.constant 0 : index
    %c0_8 = arith.constant 0 : index
    %10 = vector.load %arg4[%c0_6, %c0_7, %c0_8] : memref<2x128x128xbf16, #tpu.memory_space<vmem>>, vector<1x128x128xbf16>
    %11 = vector.shape_cast %10 : vector<1x128x128xbf16> to vector<128x128xbf16>
    %cst_9 = arith.constant dense<0.000000e+00> : vector<128x128xf32>
    %12 = tpu.matmul %9, %11, %cst_9 {dimension_numbers = #tpu.dot_dimension_numbers<[1], [0], [0], [1], [0, 0, 1, 1], [], []>} : vector<128x128xbf16>, vector<128x128xbf16>, vector<128x128xf32> -> vector<128x128xf32>
    %c0_10 = arith.constant 0 : index
    %c0_11 = arith.constant 0 : index
    %c0_12 = arith.constant 0 : index
    %13 = vector.load %arg5[%c0_10, %c0_11, %c0_12] : memref<2x1x128xf32, #tpu.memory_space<vmem>>, vector<1x1x128xf32>
    %14 = vector.shape_cast %13 : vector<1x1x128xf32> to vector<1x128xf32>
    %15 = vector.broadcast %14 : vector<1x128xf32> to vector<128x128xf32>
    %16 = arith.addf %12, %15 : vector<128x128xf32>
    %cst_13 = arith.constant 0.000000e+00 : f32
    %17 = vector.broadcast %cst_13 : f32 to vector<128x128xf32>
    %18 = arith.maximumf %16, %17 : vector<128x128xf32>
    %19 = arith.truncf %18 : vector<128x128xf32> to vector<128x128xbf16>
    %c1 = arith.constant 1 : index
    %c0_14 = arith.constant 0 : index
    %c0_15 = arith.constant 0 : index
    %20 = vector.load %arg4[%c1, %c0_14, %c0_15] : memref<2x128x128xbf16, #tpu.memory_space<vmem>>, vector<1x128x128xbf16>
    %21 = vector.shape_cast %20 : vector<1x128x128xbf16> to vector<128x128xbf16>
    %cst_16 = arith.constant dense<0.000000e+00> : vector<128x128xf32>
    %22 = tpu.matmul %19, %21, %cst_16 {dimension_numbers = #tpu.dot_dimension_numbers<[1], [0], [0], [1], [0, 0, 1, 1], [], []>} : vector<128x128xbf16>, vector<128x128xbf16>, vector<128x128xf32> -> vector<128x128xf32>
    %c1_17 = arith.constant 1 : index
    %c0_18 = arith.constant 0 : index
    %c0_19 = arith.constant 0 : index
    %23 = vector.load %arg5[%c1_17, %c0_18, %c0_19] : memref<2x1x128xf32, #tpu.memory_space<vmem>>, vector<1x1x128xf32>
    %24 = vector.shape_cast %23 : vector<1x1x128xf32> to vector<1x128xf32>
    %25 = vector.broadcast %24 : vector<1x128xf32> to vector<128x128xf32>
    %26 = arith.addf %22, %25 : vector<128x128xf32>
    %cst_20 = arith.constant 0.000000e+00 : f32
    %27 = vector.broadcast %cst_20 : f32 to vector<128x128xf32>
    %28 = arith.maximumf %26, %27 : vector<128x128xf32>
    %29 = arith.truncf %28 : vector<128x128xf32> to vector<128x128xbf16>
    %c0_21 = arith.constant 0 : index
    %c0_22 = arith.constant 0 : index
    %30 = vector.load %arg6[%c0_21, %c0_22] : memref<1x128xbf16, #tpu.memory_space<vmem>>, vector<1x128xbf16>
    %cst_23 = arith.constant dense<0.000000e+00> : vector<1x128xf32>
    %31 = tpu.matmul %30, %29, %cst_23 {dimension_numbers = #tpu.dot_dimension_numbers<[1], [1], [0], [0], [0, 0, 1, 0], [], []>} : vector<1x128xbf16>, vector<128x128xbf16>, vector<1x128xf32> -> vector<1x128xf32>
    %c0_24 = arith.constant 0 : index
    %c0_25 = arith.constant 0 : index
    %32 = vector.load %arg7[%c0_24, %c0_25] : memref<1x1xf32, #tpu.memory_space<vmem>>, vector<1x1xf32>
    %33 = vector.broadcast %32 : vector<1x1xf32> to vector<1x128xf32>
    %34 = arith.addf %31, %33 : vector<1x128xf32>
    %c0_26 = arith.constant 0 : index
    %c0_27 = arith.constant 0 : index
    %35 = vector.load %arg8[%c0_26, %c0_27] : memref<1x128xf32, #tpu.memory_space<vmem>>, vector<1x128xf32>
    tpu.vector_store %arg8[%c0_26, %c0_27], %34 {strides = array<i32>} : memref<1x128xf32, #tpu.memory_space<vmem>>, vector<1x128xf32>,
    return
  }
  func.func @transform_0(%arg0: i32) -> (i32, i32) {
    %c0_i32 = arith.constant 0 : i32
    %c0_i32_0 = arith.constant 0 : i32
    return %arg0, %c0_i32 : i32, i32
  }
  func.func @transform_1(%arg0: i32) -> (i32, i32) {
    %c0_i32 = arith.constant 0 : i32
    %c0_i32_0 = arith.constant 0 : i32
    %c0_i32_1 = arith.constant 0 : i32
    return %c0_i32, %c0_i32_0 : i32, i32
  }
  func.func @transform_2(%arg0: i32) -> (i32, i32) {
    %c0_i32 = arith.constant 0 : i32
    %c0_i32_0 = arith.constant 0 : i32
    %c0_i32_1 = arith.constant 0 : i32
    return %c0_i32, %c0_i32_0 : i32, i32
  }
  func.func @transform_3(%arg0: i32) -> (i32, i32, i32) {
    %c0_i32 = arith.constant 0 : i32
    %c0_i32_0 = arith.constant 0 : i32
    %c0_i32_1 = arith.constant 0 : i32
    %c0_i32_2 = arith.constant 0 : i32
    return %c0_i32, %c0_i32_0, %c0_i32_1 : i32, i32, i32
  }
  func.func @transform_4(%arg0: i32) -> (i32, i32, i32) {
    %c0_i32 = arith.constant 0 : i32
    %c0_i32_0 = arith.constant 0 : i32
    %c0_i32_1 = arith.constant 0 : i32
    %c0_i32_2 = arith.constant 0 : i32
    return %c0_i32, %c0_i32_0, %c0_i32_1 : i32, i32, i32
  }
  func.func @transform_5(%arg0: i32) -> (i32, i32) {
    %c0_i32 = arith.constant 0 : i32
    %c0_i32_0 = arith.constant 0 : i32
    %c0_i32_1 = arith.constant 0 : i32
    return %c0_i32, %c0_i32_0 : i32, i32
  }
  func.func @transform_6(%arg0: i32) -> (i32, i32) {
    %c0_i32 = arith.constant 0 : i32
    %c0_i32_0 = arith.constant 0 : i32
    %c0_i32_1 = arith.constant 0 : i32
    return %c0_i32, %c0_i32_0 : i32, i32
  }
  func.func @transform_7(%arg0: i32) -> (i32, i32) {
    %c0_i32 = arith.constant 0 : i32
    %c0_i32_0 = arith.constant 0 : i32
    return %c0_i32, %arg0 : i32, i32
  }
}

</mosaic_0001>

<llo_original>
// kernel: fnn_forward.1
$region0: #{fnn_forward.1}
  #allocation0 [shape = 'u32[]', space=smem, size = 0x4, offset = 0x4, fixed_abs, tag = 'smem constant byte address 0x4 - core index']
  #allocation1 [shape = 'u32[144,128]{1,0:T(1,128)}', space=vmem, size = 0x12000, scoped, tag = 'internal scratch']
  #allocation2 [shape = 'f32[1,1]{1,0:T(1,128)S(1)}', space=vmem, size = 0x200, scoped, tag = 'scoped memory for fnn_forward.1']
  %s0 = inlined_call_operand.vmem [shape: f32[512,16], index: 0, kind: input, shape index: {}]
  %s1 = inlined_call_operand.vmem [shape: bf16[16,128], index: 1, kind: input, shape index: {}]
  %s2 = inlined_call_operand.vmem [shape: f32[1,128], index: 2, kind: input, shape index: {}]
  %s3 = inlined_call_operand.vmem [shape: bf16[2,128,128], index: 3, kind: input, shape index: {}]
  %s4 = inlined_call_operand.vmem [shape: f32[2,1,128], index: 4, kind: input, shape index: {}]
  %s5 = inlined_call_operand.vmem [shape: bf16[1,128], index: 5, kind: input, shape index: {}]
  %s6 = inlined_call_operand.<no memory space> [shape: f32[1,1], index: 6, kind: input, shape index: {}]
  %s7 = inlined_call_operand.hbm [shape: f32[1,512], index: 7, kind: output, shape index: {}]
  %s8 = sld [smem:[#allocation0]]
  $region61: #{fnn_forward.1} parent=0
    _
  %s10 = ssub.s32 1, %s8
  %s11 = scalar_select 0, %s10, %s8
  %v12 = vstv %s6
  %13 = vst [vmem:[#allocation2] sm:$0x1] %v12
  $region1: #{fnn_forward.1} parent=0
    #allocation3 [shape = 'u8[1024]{0}', space=vmem, size = 0x400, scoped, tag = 'output window, operand 0']
    #allocation4 [shape = 's32[2]{0}', space=sflag, size = 0x8, scoped, tag = 'scoped memory for fnn_forward.1']
    %14 = vsyncpa [#allocation4], 0
    %s15 = scalar_lea.sflag [#allocation4], 1
    %16 = vsyncpa %s15, 0
    loop: start=0, step=1, limit=6
    $region2: #{fnn_forward.1} parent=1 // loop_pre_header
      _
    $region3: #{fnn_forward.1} parent=1 // loop_header
      %s18 = sphi 0, %s22
      %p19 = scmp.ge.s32.totalorder %s18, 6
      %s28 = sphi 0, %s30
      %s31 = sphi 0, %s28
      %s32 = sphi 0, %s31
      %s48 = sphi 0, %s32
      %s52 = sphi 0, %s52
      %s54 = sphi 0, %s52
      %s55 = sphi 0, %s54
      %s69 = sphi 0, %s55
      %s73 = sphi 0, %s73
      %s75 = sphi 0, %s73
      %s76 = sphi 0, %s75
      %s90 = sphi 0, %s76
      %s94 = sphi 0, %s94
      %s96 = sphi 0, %s94
      %s97 = sphi 0, %s96
      %s111 = sphi 0, %s97
      %s115 = sphi 0, %s115
      %s117 = sphi 0, %s115
      %s118 = sphi 0, %s117
      %s132 = sphi 0, %s118
      %s136 = sphi 0, %s136
      %s138 = sphi 0, %s136
      %s139 = sphi 0, %s138
      %s153 = sphi 0, %s139
      %s157 = sphi 0, %s157
      %s159 = sphi 0, %s157
      %s160 = sphi 0, %s159
      %s174 = sphi 0, %s160
      %s180 = sphi 0, %s182
      %s183 = sphi 0, %s180
      %s184 = sphi 0, %s183
      %s200 = sphi 0, %s184
    $region4: #{fnn_forward.1} parent=1 // loop_header_branch
      %21 = sbr.rel (%p19) target = $region8
    $region5: #{fnn_forward.1} parent=1 // loop_body
      %s23 = ssub.s32 %s18, 1
      %s24 = ssub.s32 %s18, 2
      %s25 = sadd.s32 %s18, 1
      %s26 = ssub.s32 %s18, %s25
      %p27 = scmp.eq.s32.totalorder %s26, 0
      %s29 = sadd.s32 %s28, 1
      %s30 = scalar_select %p27, %s28, %s29
      %p33 = pneg %p27
      %p34 = scmp.eq.s32.totalorder %s18, 3
      %p35 = por %p33, %p34
      %p36 = scmp.ne.s32.totalorder %s28, %s31
      %p37 = scmp.eq.s32.totalorder %s18, 0
      %p38 = por %p36, %p37
      %p39 = scmp.ne.s32.totalorder %s28, %s31
      %p40 = scmp.eq.s32.totalorder %s23, 3
      %p41 = por %p39, %p40
      %p42 = scmp.ne.s32.totalorder %s31, %s32
      %p43 = scmp.eq.s32.totalorder %s23, 0
      %p44 = por %p42, %p43
      %p45 = scmp.ne.s32.totalorder %s31, %s32
      %p46 = scmp.eq.s32.totalorder %s24, 3
      %p47 = por %p45, %p46
      %p49 = scmp.ne.s32.totalorder %s32, %s48
      %p50 = scmp.eq.s32.totalorder %s24, 0
      %p51 = por %p49, %p50
      %s53 = sadd.s32 %s52, 1
      %p56 = scmp.eq.s32.totalorder %s18, 3
      %p57 = scmp.ne.s32.totalorder %s52, %s54
      %p58 = scmp.eq.s32.totalorder %s18, 0
      %p59 = por %p57, %p58
      %p60 = scmp.ne.s32.totalorder %s52, %s54
      %p61 = scmp.eq.s32.totalorder %s23, 3
      %p62 = por %p60, %p61
      %p63 = scmp.ne.s32.totalorder %s54, %s55
      %p64 = scmp.eq.s32.totalorder %s23, 0
      %p65 = por %p63, %p64
      %p66 = scmp.ne.s32.totalorder %s54, %s55
      %p67 = scmp.eq.s32.totalorder %s24, 3
      %p68 = por %p66, %p67
      %p70 = scmp.ne.s32.totalorder %s55, %s69
      %p71 = scmp.eq.s32.totalorder %s24, 0
      %p72 = por %p70, %p71
      %s74 = sadd.s32 %s73, 1
      %p77 = scmp.eq.s32.totalorder %s18, 3
      %p78 = scmp.ne.s32.totalorder %s73, %s75
      %p79 = scmp.eq.s32.totalorder %s18, 0
      %p80 = por %p78, %p79
      %p81 = scmp.ne.s32.totalorder %s73, %s75
      %p82 = scmp.eq.s32.totalorder %s23, 3
      %p83 = por %p81, %p82
      %p84 = scmp.ne.s32.totalorder %s75, %s76
      %p85 = scmp.eq.s32.totalorder %s23, 0
      %p86 = por %p84, %p85
      %p87 = scmp.ne.s32.totalorder %s75, %s76
      %p88 = scmp.eq.s32.totalorder %s24, 3
      %p89 = por %p87, %p88
      %p91 = scmp.ne.s32.totalorder %s76, %s90
      %p92 = scmp.eq.s32.totalorder %s24, 0
      %p93 = por %p91, %p92
      %s95 = sadd.s32 %s94, 1
      %p98 = scmp.eq.s32.totalorder %s18, 3
      %p99 = scmp.ne.s32.totalorder %s94, %s96
      %p100 = scmp.eq.s32.totalorder %s18, 0
      %p101 = por %p99, %p100
      %p102 = scmp.ne.s32.totalorder %s94, %s96
      %p103 = scmp.eq.s32.totalorder %s23, 3
      %p104 = por %p102, %p103
      %p105 = scmp.ne.s32.totalorder %s96, %s97
      %p106 = scmp.eq.s32.totalorder %s23, 0
      %p107 = por %p105, %p106
      %p108 = scmp.ne.s32.totalorder %s96, %s97
      %p109 = scmp.eq.s32.totalorder %s24, 3
      %p110 = por %p108, %p109
      %p112 = scmp.ne.s32.totalorder %s97, %s111
      %p113 = scmp.eq.s32.totalorder %s24, 0
      %p114 = por %p112, %p113
      %s116 = sadd.s32 %s115, 1
      %p119 = scmp.eq.s32.totalorder %s18, 3
      %p120 = scmp.ne.s32.totalorder %s115, %s117
      %p121 = scmp.eq.s32.totalorder %s18, 0
      %p122 = por %p120, %p121
      %p123 = scmp.ne.s32.totalorder %s115, %s117
      %p124 = scmp.eq.s32.totalorder %s23, 3
      %p125 = por %p123, %p124
      %p126 = scmp.ne.s32.totalorder %s117, %s118
      %p127 = scmp.eq.s32.totalorder %s23, 0
      %p128 = por %p126, %p127
      %p129 = scmp.ne.s32.totalorder %s117, %s118
      %p130 = scmp.eq.s32.totalorder %s24, 3
      %p131 = por %p129, %p130
      %p133 = scmp.ne.s32.totalorder %s118, %s132
      %p134 = scmp.eq.s32.totalorder %s24, 0
      %p135 = por %p133, %p134
      %s137 = sadd.s32 %s136, 1
      %p140 = scmp.eq.s32.totalorder %s18, 3
      %p141 = scmp.ne.s32.totalorder %s136, %s138
      %p142 = scmp.eq.s32.totalorder %s18, 0
      %p143 = por %p141, %p142
      %p144 = scmp.ne.s32.totalorder %s136, %s138
      %p145 = scmp.eq.s32.totalorder %s23, 3
      %p146 = por %p144, %p145
      %p147 = scmp.ne.s32.totalorder %s138, %s139
      %p148 = scmp.eq.s32.totalorder %s23, 0
      %p149 = por %p147, %p148
      %p150 = scmp.ne.s32.totalorder %s138, %s139
      %p151 = scmp.eq.s32.totalorder %s24, 3
      %p152 = por %p150, %p151
      %p154 = scmp.ne.s32.totalorder %s139, %s153
      %p155 = scmp.eq.s32.totalorder %s24, 0
      %p156 = por %p154, %p155
      %s158 = sadd.s32 %s157, 1
      %p161 = scmp.eq.s32.totalorder %s18, 3
      %p162 = scmp.ne.s32.totalorder %s157, %s159
      %p163 = scmp.eq.s32.totalorder %s18, 0
      %p164 = por %p162, %p163
      %p165 = scmp.ne.s32.totalorder %s157, %s159
      %p166 = scmp.eq.s32.totalorder %s23, 3
      %p167 = por %p165, %p166
      %p168 = scmp.ne.s32.totalorder %s159, %s160
      %p169 = scmp.eq.s32.totalorder %s23, 0
      %p170 = por %p168, %p169
      %p171 = scmp.ne.s32.totalorder %s159, %s160
      %p172 = scmp.eq.s32.totalorder %s24, 3
      %p173 = por %p171, %p172
      %p175 = scmp.ne.s32.totalorder %s160, %s174
      %p176 = scmp.eq.s32.totalorder %s24, 0
      %p177 = por %p175, %p176
      %s178 = ssub.s32 %s18, %s25
      %p179 = scmp.eq.s32.totalorder %s178, 0
      %s181 = sadd.s32 %s180, 1
      %s182 = scalar_select %p179, %s180, %s181
      %p185 = pneg %p179
      %p186 = scmp.eq.s32.totalorder %s18, 3
      %p187 = por %p185, %p186
      %p188 = scmp.ne.s32.totalorder %s180, %s183
      %p189 = scmp.eq.s32.totalorder %s18, 0
      %p190 = por %p188, %p189
      %p191 = scmp.ne.s32.totalorder %s180, %s183
      %p192 = scmp.eq.s32.totalorder %s23, 3
      %p193 = por %p191, %p192
      %p194 = scmp.ne.s32.totalorder %s183, %s184
      %p195 = scmp.eq.s32.totalorder %s23, 0
      %p196 = por %p194, %p195
      %p197 = scmp.ne.s32.totalorder %s183, %s184
      %p198 = scmp.eq.s32.totalorder %s24, 3
      %p199 = por %p197, %p198
      %p201 = scmp.ne.s32.totalorder %s184, %s200
      %p202 = scmp.eq.s32.totalorder %s24, 0
      %p203 = por %p201, %p202
      %p204 = scmp.le.s32.totalorder 1, %s18
      %p205 = scmp.lt.s32.totalorder %s18, 5
      %p206 = pnand %p204, %p205
      %p207 = pneg %p206
      // Predicated region
      $region9: #{fnn_forward.1} parent=5 // pred_check
        _
      $region10: #{fnn_forward.1} parent=5 // pred_check_branch
        %209 = sbr.rel (%p206) target = $region12
      $region11: #{fnn_forward.1} parent=5 // pred_region
        %s210 = ssub.s32 %s18, 1
        // Predicated region
        $region13: #{fnn_forward.1} parent=11 // pred_check
          %p211 = pneg %p65
        $region14: #{fnn_forward.1} parent=11 // pred_check_branch
          %213 = sbr.rel (%p211) target = $region16
        $region15: #{fnn_forward.1} parent=11 // pred_region
          _
        $region16: #{fnn_forward.1} parent=11 // pred_fallthru
          _
        // Predicated region
        $region17: #{fnn_forward.1} parent=11 // pred_check
          %p214 = pneg %p86
        $region18: #{fnn_forward.1} parent=11 // pred_check_branch
          %216 = sbr.rel (%p214) target = $region20
        $region19: #{fnn_forward.1} parent=11 // pred_region
          _
        $region20: #{fnn_forward.1} parent=11 // pred_fallthru
          _
        // Predicated region
        $region21: #{fnn_forward.1} parent=11 // pred_check
          %p217 = pneg %p107
        $region22: #{fnn_forward.1} parent=11 // pred_check_branch
          %219 = sbr.rel (%p217) target = $region24
        $region23: #{fnn_forward.1} parent=11 // pred_region
          _
        $region24: #{fnn_forward.1} parent=11 // pred_fallthru
          _
        // Predicated region
        $region25: #{fnn_forward.1} parent=11 // pred_check
          %p220 = pneg %p128
        $region26: #{fnn_forward.1} parent=11 // pred_check_branch
          %222 = sbr.rel (%p220) target = $region28
        $region27: #{fnn_forward.1} parent=11 // pred_region
          _
        $region28: #{fnn_forward.1} parent=11 // pred_fallthru
          _
        // Predicated region
        $region29: #{fnn_forward.1} parent=11 // pred_check
          %p223 = pneg %p149
        $region30: #{fnn_forward.1} parent=11 // pred_check_branch
          %225 = sbr.rel (%p223) target = $region32
        $region31: #{fnn_forward.1} parent=11 // pred_region
          _
        $region32: #{fnn_forward.1} parent=11 // pred_fallthru
          _
        // Predicated region
        $region33: #{fnn_forward.1} parent=11 // pred_check
          %p226 = pneg %p170
        $region34: #{fnn_forward.1} parent=11 // pred_check_branch
          %228 = sbr.rel (%p226) target = $region36
        $region35: #{fnn_forward.1} parent=11 // pred_region
          _
        $region36: #{fnn_forward.1} parent=11 // pred_fallthru
          _
      $region12: #{fnn_forward.1} parent=5 // pred_fallthru
        _
      %p229 = scmp.lt.s32.totalorder %s18, 4
      // Predicated region
      $region37: #{fnn_forward.1} parent=5 // pred_check
        %p230 = pneg %p229
      $region38: #{fnn_forward.1} parent=5 // pred_check_branch
        %232 = sbr.rel (%p230) target = $region40
      $region39: #{fnn_forward.1} parent=5 // pred_region
        // Predicated region
        $region41: #{fnn_forward.1} parent=39 // pred_check
          %p233 = pneg %p38
        $region42: #{fnn_forward.1} parent=39 // pred_check_branch
          %235 = sbr.rel (%p233) target = $region44
        $region43: #{fnn_forward.1} parent=39 // pred_region
          %s236 = smul.u32 16, %s18
          %p237 = scmp.lt.s32.totalorder %s236, 63
          %s238 = scalar_select %p237, %s236, 63
          %s239 = smul.addr %s238, 8
          %s240 = scalar_lea.vmem %s0, %s239
          %s241 = smul.u32 16, %s18
        $region44: #{fnn_forward.1} parent=39 // pred_fallthru
          _
      $region40: #{fnn_forward.1} parent=5 // pred_fallthru
        _
      %p242 = scmp.le.s32.totalorder 1, %s18
      %p243 = scmp.lt.s32.totalorder %s18, 5
      %p244 = pnand %p242, %p243
      %p245 = pneg %p244
      // Predicated region
      $region45: #{fnn_forward.1} parent=5 // pred_check
        _
      $region46: #{fnn_forward.1} parent=5 // pred_check_branch
        %247 = sbr.rel (%p244) target = $region48
      $region47: #{fnn_forward.1} parent=5 // pred_region
        %s248 = ssub.s32 %s18, 1
        %s249 = smul.u32 16, %s23
        %p250 = scmp.lt.s32.totalorder %s249, 63
        %s251 = scalar_select %p250, %s249, 63
        %s252 = smul.addr %s251, 8
        %s253 = scalar_lea.vmem %s0, %s252
        %p254 = pneg %p44
        %p255 = pneg %p41
        %p256 = pneg %p65
        %p257 = pneg %p62
        %p258 = pneg %p86
        %p259 = pneg %p83
        %p260 = pneg %p107
        %p261 = pneg %p104
        %p262 = pneg %p128
        %p263 = pneg %p125
        %p264 = pneg %p149
        %p265 = pneg %p146
        %p266 = pneg %p170
        %p267 = pneg %p167
        %p268 = pneg %p196
        %p269 = pneg %p193
        %s270 = sand.u32 %s183, 1
        %s271 = scalar_lea.sflag [#allocation4], %s270
        %s272 = sand.u32 %s183, 1
        %s273 = scalar_lea.vmem [#allocation3], %s272
        %s274 = smul.u32 16, %s23
        %p275 = scmp.lt.s32.totalorder %s274, 63
        %s276 = scalar_select %p275, %s274, 63
        %s277 = smul.addr %s276, 8
        %s278 = scalar_lea.vmem %s0, %s277
        %s279 = smul.u32 16, %s23
        %v281 = vld [vmem:[%s278] sm:$0xff]
        %v282 = vld [vmem:[%s278 + $0x8] sm:$0xff]
        %v283 = vld [vmem:[%s278 + $0x10] sm:$0xff]
        %v284 = vld [vmem:[%s278 + $0x18] sm:$0xff]
        %v285 = vld [vmem:[%s278 + $0x20] sm:$0xff]
        %v286 = vld [vmem:[%s278 + $0x28] sm:$0xff]
        %v287 = vld [vmem:[%s278 + $0x30] sm:$0xff]
        %v288 = vld [vmem:[%s278 + $0x38] sm:$0xff]
        %v289 = vld [vmem:[%s278 + $0x40] sm:$0xff]
        %v290 = vld [vmem:[%s278 + $0x48] sm:$0xff]
        %v291 = vld [vmem:[%s278 + $0x50] sm:$0xff]
        %v292 = vld [vmem:[%s278 + $0x58] sm:$0xff]
        %v293 = vld [vmem:[%s278 + $0x60] sm:$0xff]
        %v294 = vld [vmem:[%s278 + $0x68] sm:$0xff]
        %v295 = vld [vmem:[%s278 + $0x70] sm:$0xff]
        %v296 = vld [vmem:[%s278 + $0x78] sm:$0xff]
        %v297 = vpack.c.bf16 %v282, %v281
        %v298 = vpack.c.bf16 %v284, %v283
        %v299 = vpack.c.bf16 %v286, %v285
        %v300 = vpack.c.bf16 %v288, %v287
        %v301 = vpack.c.bf16 %v290, %v289
        %v302 = vpack.c.bf16 %v292, %v291
        %v303 = vpack.c.bf16 %v294, %v293
        %v304 = vpack.c.bf16 %v296, %v295
        %v305 = vld [vmem:[%s1] sm:$0xf]
        %v306 = vld [vmem:[%s1 + $0x4] sm:$0xf]
        %v307 = vld [vmem:[%s2] sm:$0x1]
        %v309 = vlaneseq
        %v310 = vshrl.u32 %v309, 7
        %v311 = vsub.s32 0, %v310
        %v312 = vrot.slane %v307, %v311
        %v316 = vunpack.c.l.b16 %v305
        %v317 = vunpack.c.l.b16 %v306
        %v318 = vpack.c.b16 %v317, %v316
        %vm320 = vcmask 130048
        %v322 = vsel %vm320, %v297, 0
        %v325 = vsel %vm320, %v298, 0
        %v328 = vsel %vm320, %v299, 0
        %v331 = vsel %vm320, %v300, 0
        %v334 = vsel %vm320, %v301, 0
        %v337 = vsel %vm320, %v302, 0
        %v340 = vsel %vm320, %v303, 0
        %v343 = vsel %vm320, %v304, 0
        %345 = vmatprep.subr.bf16.mxu0 0
        %346 = vmatpush1.bf16.msra.mxu0 0
        %347 = vmatprep.subr.bf16.mxu0 0
        %348 = vmatpush1.bf16.msra.mxu0 0
        %349 = vmatprep.subr.bf16.mxu0 0
        %350 = vmatpush1.bf16.msra.mxu0 0
        %351 = vmatprep.subr.bf16.mxu0 0
        %352 = vmatpush1.bf16.msra.mxu0 0
        %353 = vmatprep.subr.bf16.mxu0 0
        %354 = vmatpush1.bf16.msra.mxu0 0
        %355 = vmatprep.subr.bf16.mxu0 0
        %356 = vmatpush1.bf16.msra.mxu0 0
        %357 = vmatprep.subr.bf16.mxu0 0
        %358 = vmatpush1.bf16.msra.mxu0 0
        %359 = vmatprep.subr.bf16.mxu0 0
        %360 = vmatpush1.bf16.msra.mxu0 %v318
        %361 = vmatprep.subr.bf16.mxu0 0
        %362 = vmatpush2.bf16.msra.mxu0 0
        %363 = vmatprep.subr.bf16.mxu0 0
        %364 = vmatpush2.bf16.msra.mxu0 0
        %365 = vmatprep.subr.bf16.mxu0 0
        %366 = vmatpush2.bf16.msra.mxu0 0
        %367 = vmatprep.subr.bf16.mxu0 0
        %368 = vmatpush2.bf16.msra.mxu0 0
        %369 = vmatprep.subr.bf16.mxu0 0
        %370 = vmatpush2.bf16.msra.mxu0 0
        %371 = vmatprep.subr.bf16.mxu0 0
        %372 = vmatpush2.bf16.msra.mxu0 0
        %373 = vmatprep.subr.bf16.mxu0 0
        %374 = vmatpush2.bf16.msra.mxu0 0
        %375 = vmatprep.subr.bf16.mxu0 0
        %376 = vmatpush2.bf16.msra.mxu0 0
        %377 = vmatprep.mubr.bf16.mxu0 0
        %378 = vmatmul.mubr.bf16.gmra.mxu0 %v322
        %v379 = vpop.f32.mrf.mxu0
        %v380 = vadd.f32 %v312, %v379
        %v381 = vpop.f32.mrf.mxu0
        %v382 = vpop.f32.mrf.mxu0
        %v383 = vadd.f32 %v312, %v382
        %v384 = vpop.f32.mrf.mxu0
        %385 = vmatprep.mubr.bf16.mxu0 0
        %386 = vmatmul.mubr.bf16.gmra.mxu0 %v325
        %v387 = vpop.f32.mrf.mxu0
        %v388 = vadd.f32 %v312, %v387
        %v389 = vpop.f32.mrf.mxu0
        %v390 = vpop.f32.mrf.mxu0
        %v391 = vadd.f32 %v312, %v390
        %v392 = vpop.f32.mrf.mxu0
        %393 = vmatprep.mubr.bf16.mxu0 0
        %394 = vmatmul.mubr.bf16.gmra.mxu0 %v328
        %v395 = vpop.f32.mrf.mxu0
        %v396 = vadd.f32 %v312, %v395
        %v397 = vpop.f32.mrf.mxu0
        %v398 = vpop.f32.mrf.mxu0
        %v399 = vadd.f32 %v312, %v398
        %v400 = vpop.f32.mrf.mxu0
        %401 = vmatprep.mubr.bf16.mxu0 0
        %402 = vmatmul.mubr.bf16.gmra.mxu0 %v331
        %v403 = vpop.f32.mrf.mxu0
        %v404 = vadd.f32 %v312, %v403
        %v405 = vpop.f32.mrf.mxu0
        %v406 = vpop.f32.mrf.mxu0
        %v407 = vadd.f32 %v312, %v406
        %v408 = vpop.f32.mrf.mxu0
        %409 = vmatprep.mubr.bf16.mxu0 0
        %410 = vmatmul.mubr.bf16.gmra.mxu0 %v334
        %v411 = vpop.f32.mrf.mxu0
        %v412 = vadd.f32 %v312, %v411
        %v413 = vpop.f32.mrf.mxu0
        %v414 = vpop.f32.mrf.mxu0
        %v415 = vadd.f32 %v312, %v414
        %v416 = vpop.f32.mrf.mxu0
        %417 = vmatprep.mubr.bf16.mxu0 0
        %418 = vmatmul.mubr.bf16.gmra.mxu0 %v337
        %v419 = vpop.f32.mrf.mxu0
        %v420 = vadd.f32 %v312, %v419
        %v421 = vpop.f32.mrf.mxu0
        %v422 = vpop.f32.mrf.mxu0
        %v423 = vadd.f32 %v312, %v422
        %v424 = vpop.f32.mrf.mxu0
        %425 = vmatprep.mubr.bf16.mxu0 0
        %426 = vmatmul.mubr.bf16.gmra.mxu0 %v340
        %v427 = vpop.f32.mrf.mxu0
        %v428 = vadd.f32 %v312, %v427
        %v429 = vpop.f32.mrf.mxu0
        %v430 = vpop.f32.mrf.mxu0
        %v431 = vadd.f32 %v312, %v430
        %v432 = vpop.f32.mrf.mxu0
        %433 = vmatprep.mubr.bf16.mxu0 0
        %434 = vmatmul.mubr.bf16.gmra.mxu0 %v343
        %v435 = vpop.f32.mrf.mxu0
        %v436 = vadd.f32 %v312, %v435
        %v437 = vpop.f32.mrf.mxu0
        %v438 = vpop.f32.mrf.mxu0
        %v439 = vadd.f32 %v312, %v438
        %v440 = vpop.f32.mrf.mxu0
        %441 = vdwg.mxu0
        %v442 = vmax.f32 %v380, 0.0
        %v443 = vmax.f32 %v383, 0.0
        %v444 = vmax.f32 %v388, 0.0
        %v445 = vmax.f32 %v391, 0.0
        %v446 = vmax.f32 %v396, 0.0
        %v447 = vmax.f32 %v399, 0.0
        %v448 = vmax.f32 %v404, 0.0
        %v449 = vmax.f32 %v407, 0.0
        %v450 = vmax.f32 %v412, 0.0
        %v451 = vmax.f32 %v415, 0.0
        %v452 = vmax.f32 %v420, 0.0
        %v453 = vmax.f32 %v423, 0.0
        %v454 = vmax.f32 %v428, 0.0
        %v455 = vmax.f32 %v431, 0.0
        %v456 = vmax.f32 %v436, 0.0
        %v457 = vmax.f32 %v439, 0.0
        %v458 = vpack.c.bf16 %v443, %v442
        %v459 = vpack.c.bf16 %v445, %v444
        %v460 = vpack.c.bf16 %v447, %v446
        %v461 = vpack.c.bf16 %v449, %v448
        %v462 = vpack.c.bf16 %v451, %v450
        %v463 = vpack.c.bf16 %v453, %v452
        %v464 = vpack.c.bf16 %v455, %v454
        %v465 = vpack.c.bf16 %v457, %v456
        %v466 = vld [vmem:[%s3] sm:$0xf]
        %v467 = vld [vmem:[%s3 + $0x4] sm:$0xf]
        %v468 = vld [vmem:[%s3 + $0x8] sm:$0xf]
        %v469 = vld [vmem:[%s3 + $0xc] sm:$0xf]
        %v470 = vld [vmem:[%s3 + $0x10] sm:$0xf]
        %v471 = vld [vmem:[%s3 + $0x14] sm:$0xf]
        %v472 = vld [vmem:[%s3 + $0x18] sm:$0xf]
        %v473 = vld [vmem:[%s3 + $0x1c] sm:$0xf]
        %v474 = vld [vmem:[%s3 + $0x20] sm:$0xf]
        %v475 = vld [vmem:[%s3 + $0x24] sm:$0xf]
        %v476 = vld [vmem:[%s3 + $0x28] sm:$0xf]
        %v477 = vld [vmem:[%s3 + $0x2c] sm:$0xf]
        %v478 = vld [vmem:[%s3 + $0x30] sm:$0xf]
        %v479 = vld [vmem:[%s3 + $0x34] sm:$0xf]
        %v480 = vld [vmem:[%s3 + $0x38] sm:$0xf]
        %v481 = vld [vmem:[%s3 + $0x3c] sm:$0xf]
        %v482 = vld [vmem:[%s4] sm:$0x1]
        %v484 = vlaneseq
        %v485 = vshrl.u32 %v484, 7
        %v486 = vsub.s32 0, %v485
        %v487 = vrot.slane %v482, %v486
        %v505 = vunpack.c.l.b16 %v466
        %v506 = vunpack.c.l.b16 %v467
        %v507 = vunpack.c.l.b16 %v468
        %v508 = vunpack.c.l.b16 %v469
        %v509 = vunpack.c.l.b16 %v470
        %v510 = vunpack.c.l.b16 %v471
        %v511 = vunpack.c.l.b16 %v472
        %v512 = vunpack.c.l.b16 %v473
        %v513 = vunpack.c.l.b16 %v474
        %v514 = vunpack.c.l.b16 %v475
        %v515 = vunpack.c.l.b16 %v476
        %v516 = vunpack.c.l.b16 %v477
        %v517 = vunpack.c.l.b16 %v478
        %v518 = vunpack.c.l.b16 %v479
        %v519 = vunpack.c.l.b16 %v480
        %v520 = vunpack.c.l.b16 %v481
        %v521 = vpack.c.b16 %v506, %v505
        %v522 = vpack.c.b16 %v508, %v507
        %v523 = vpack.c.b16 %v510, %v509
        %v524 = vpack.c.b16 %v512, %v511
        %v525 = vpack.c.b16 %v514, %v513
        %v526 = vpack.c.b16 %v516, %v515
        %v527 = vpack.c.b16 %v518, %v517
        %v528 = vpack.c.b16 %v520, %v519
        %537 = vmatprep.subr.bf16.mxu0 0
        %538 = vmatpush1.bf16.msra.mxu0 %v528
        %539 = vmatprep.subr.bf16.mxu0 0
        %540 = vmatpush1.bf16.msra.mxu0 %v527
        %541 = vmatprep.subr.bf16.mxu0 0
        %542 = vmatpush1.bf16.msra.mxu0 %v526
        %543 = vmatprep.subr.bf16.mxu0 0
        %544 = vmatpush1.bf16.msra.mxu0 %v525
        %545 = vmatprep.subr.bf16.mxu0 0
        %546 = vmatpush1.bf16.msra.mxu0 %v524
        %547 = vmatprep.subr.bf16.mxu0 0
        %548 = vmatpush1.bf16.msra.mxu0 %v523
        %549 = vmatprep.subr.bf16.mxu0 0
        %550 = vmatpush1.bf16.msra.mxu0 %v522
        %551 = vmatprep.subr.bf16.mxu0 0
        %552 = vmatpush1.bf16.msra.mxu0 %v521
        %553 = vmatprep.subr.bf16.mxu0 0
        %554 = vmatpush2.bf16.msra.mxu0 0
        %555 = vmatprep.subr.bf16.mxu0 0
        %556 = vmatpush2.bf16.msra.mxu0 0
        %557 = vmatprep.subr.bf16.mxu0 0
        %558 = vmatpush2.bf16.msra.mxu0 0
        %559 = vmatprep.subr.bf16.mxu0 0
        %560 = vmatpush2.bf16.msra.mxu0 0
        %561 = vmatprep.subr.bf16.mxu0 0
        %562 = vmatpush2.bf16.msra.mxu0 0
        %563 = vmatprep.subr.bf16.mxu0 0
        %564 = vmatpush2.bf16.msra.mxu0 0
        %565 = vmatprep.subr.bf16.mxu0 0
        %566 = vmatpush2.bf16.msra.mxu0 0
        %567 = vmatprep.subr.bf16.mxu0 0
        %568 = vmatpush2.bf16.msra.mxu0 0
        %569 = vmatprep.mubr.bf16.mxu0 0
        %570 = vmatmul.mubr.bf16.gmra.mxu0 %v458
        %v571 = vpop.f32.mrf.mxu0
        %v572 = vadd.f32 %v487, %v571
        %v573 = vpop.f32.mrf.mxu0
        %v574 = vpop.f32.mrf.mxu0
        %v575 = vadd.f32 %v487, %v574
        %v576 = vpop.f32.mrf.mxu0
        %577 = vmatprep.mubr.bf16.mxu0 0
        %578 = vmatmul.mubr.bf16.gmra.mxu0 %v459
        %v579 = vpop.f32.mrf.mxu0
        %v580 = vadd.f32 %v487, %v579
        %v581 = vpop.f32.mrf.mxu0
        %v582 = vpop.f32.mrf.mxu0
        %v583 = vadd.f32 %v487, %v582
        %v584 = vpop.f32.mrf.mxu0
        %585 = vmatprep.mubr.bf16.mxu0 0
        %586 = vmatmul.mubr.bf16.gmra.mxu0 %v460
        %v587 = vpop.f32.mrf.mxu0
        %v588 = vadd.f32 %v487, %v587
        %v589 = vpop.f32.mrf.mxu0
        %v590 = vpop.f32.mrf.mxu0
        %v591 = vadd.f32 %v487, %v590
        %v592 = vpop.f32.mrf.mxu0
        %593 = vmatprep.mubr.bf16.mxu0 0
        %594 = vmatmul.mubr.bf16.gmra.mxu0 %v461
        %v595 = vpop.f32.mrf.mxu0
        %v596 = vadd.f32 %v487, %v595
        %v597 = vpop.f32.mrf.mxu0
        %v598 = vpop.f32.mrf.mxu0
        %v599 = vadd.f32 %v487, %v598
        %v600 = vpop.f32.mrf.mxu0
        %601 = vmatprep.mubr.bf16.mxu0 0
        %602 = vmatmul.mubr.bf16.gmra.mxu0 %v462
        %v603 = vpop.f32.mrf.mxu0
        %v604 = vadd.f32 %v487, %v603
        %v605 = vpop.f32.mrf.mxu0
        %v606 = vpop.f32.mrf.mxu0
        %v607 = vadd.f32 %v487, %v606
        %v608 = vpop.f32.mrf.mxu0
        %609 = vmatprep.mubr.bf16.mxu0 0
        %610 = vmatmul.mubr.bf16.gmra.mxu0 %v463
        %v611 = vpop.f32.mrf.mxu0
        %v612 = vadd.f32 %v487, %v611
        %v613 = vpop.f32.mrf.mxu0
        %v614 = vpop.f32.mrf.mxu0
        %v615 = vadd.f32 %v487, %v614
        %v616 = vpop.f32.mrf.mxu0
        %617 = vmatprep.mubr.bf16.mxu0 0
        %618 = vmatmul.mubr.bf16.gmra.mxu0 %v464
        %v619 = vpop.f32.mrf.mxu0
        %v620 = vadd.f32 %v487, %v619
        %v621 = vpop.f32.mrf.mxu0
        %v622 = vpop.f32.mrf.mxu0
        %v623 = vadd.f32 %v487, %v622
        %v624 = vpop.f32.mrf.mxu0
        %625 = vmatprep.mubr.bf16.mxu0 0
        %626 = vmatmul.mubr.bf16.gmra.mxu0 %v465
        %v627 = vpop.f32.mrf.mxu0
        %v628 = vadd.f32 %v487, %v627
        %v629 = vpop.f32.mrf.mxu0
        %v630 = vpop.f32.mrf.mxu0
        %v631 = vadd.f32 %v487, %v630
        %v632 = vpop.f32.mrf.mxu0
        %633 = vdwg.mxu0
        %v634 = vmax.f32 %v572, 0.0
        %v635 = vmax.f32 %v575, 0.0
        %v636 = vmax.f32 %v580, 0.0
        %v637 = vmax.f32 %v583, 0.0
        %v638 = vmax.f32 %v588, 0.0
        %v639 = vmax.f32 %v591, 0.0
        %v640 = vmax.f32 %v596, 0.0
        %v641 = vmax.f32 %v599, 0.0
        %v642 = vmax.f32 %v604, 0.0
        %v643 = vmax.f32 %v607, 0.0
        %v644 = vmax.f32 %v612, 0.0
        %v645 = vmax.f32 %v615, 0.0
        %v646 = vmax.f32 %v620, 0.0
        %v647 = vmax.f32 %v623, 0.0
        %v648 = vmax.f32 %v628, 0.0
        %v649 = vmax.f32 %v631, 0.0
        %v650 = vpack.c.bf16 %v635, %v634
        %v651 = vpack.c.bf16 %v637, %v636
        %v652 = vpack.c.bf16 %v639, %v638
        %v653 = vpack.c.bf16 %v641, %v640
        %v654 = vpack.c.bf16 %v643, %v642
        %v655 = vpack.c.bf16 %v645, %v644
        %v656 = vpack.c.bf16 %v647, %v646
        %v657 = vpack.c.bf16 %v649, %v648
        %s658 = scalar_lea.vmem %s3, 64
        %v659 = vld [vmem:[%s658] sm:$0xf]
        %v660 = vld [vmem:[%s658 + $0x4] sm:$0xf]
        %v661 = vld [vmem:[%s658 + $0x8] sm:$0xf]
        %v662 = vld [vmem:[%s658 + $0xc] sm:$0xf]
        %v663 = vld [vmem:[%s658 + $0x10] sm:$0xf]
        %v664 = vld [vmem:[%s658 + $0x14] sm:$0xf]
        %v665 = vld [vmem:[%s658 + $0x18] sm:$0xf]
        %v666 = vld [vmem:[%s658 + $0x1c] sm:$0xf]
        %v667 = vld [vmem:[%s658 + $0x20] sm:$0xf]
        %v668 = vld [vmem:[%s658 + $0x24] sm:$0xf]
        %v669 = vld [vmem:[%s658 + $0x28] sm:$0xf]
        %v670 = vld [vmem:[%s658 + $0x2c] sm:$0xf]
        %v671 = vld [vmem:[%s658 + $0x30] sm:$0xf]
        %v672 = vld [vmem:[%s658 + $0x34] sm:$0xf]
        %v673 = vld [vmem:[%s658 + $0x38] sm:$0xf]
        %v674 = vld [vmem:[%s658 + $0x3c] sm:$0xf]
        %s675 = scalar_lea.vmem %s4, 1
        %v676 = vld [vmem:[%s675] sm:$0x1]
        %v678 = vlaneseq
        %v679 = vshrl.u32 %v678, 7
        %v680 = vsub.s32 0, %v679
        %v681 = vrot.slane %v676, %v680
        %v699 = vunpack.c.l.b16 %v659
        %v700 = vunpack.c.l.b16 %v660
        %v701 = vunpack.c.l.b16 %v661
        %v702 = vunpack.c.l.b16 %v662
        %v703 = vunpack.c.l.b16 %v663
        %v704 = vunpack.c.l.b16 %v664
        %v705 = vunpack.c.l.b16 %v665
        %v706 = vunpack.c.l.b16 %v666
        %v707 = vunpack.c.l.b16 %v667
        %v708 = vunpack.c.l.b16 %v668
        %v709 = vunpack.c.l.b16 %v669
        %v710 = vunpack.c.l.b16 %v670
        %v711 = vunpack.c.l.b16 %v671
        %v712 = vunpack.c.l.b16 %v672
        %v713 = vunpack.c.l.b16 %v673
        %v714 = vunpack.c.l.b16 %v674
        %v715 = vpack.c.b16 %v700, %v699
        %v716 = vpack.c.b16 %v702, %v701
        %v717 = vpack.c.b16 %v704, %v703
        %v718 = vpack.c.b16 %v706, %v705
        %v719 = vpack.c.b16 %v708, %v707
        %v720 = vpack.c.b16 %v710, %v709
        %v721 = vpack.c.b16 %v712, %v711
        %v722 = vpack.c.b16 %v714, %v713
        %731 = vmatprep.subr.bf16.mxu0 0
        %732 = vmatpush1.bf16.msra.mxu0 %v722
        %733 = vmatprep.subr.bf16.mxu0 0
        %734 = vmatpush1.bf16.msra.mxu0 %v721
        %735 = vmatprep.subr.bf16.mxu0 0
        %736 = vmatpush1.bf16.msra.mxu0 %v720
        %737 = vmatprep.subr.bf16.mxu0 0
        %738 = vmatpush1.bf16.msra.mxu0 %v719
        %739 = vmatprep.subr.bf16.mxu0 0
        %740 = vmatpush1.bf16.msra.mxu0 %v718
        %741 = vmatprep.subr.bf16.mxu0 0
        %742 = vmatpush1.bf16.msra.mxu0 %v717
        %743 = vmatprep.subr.bf16.mxu0 0
        %744 = vmatpush1.bf16.msra.mxu0 %v716
        %745 = vmatprep.subr.bf16.mxu0 0
        %746 = vmatpush1.bf16.msra.mxu0 %v715
        %747 = vmatprep.subr.bf16.mxu0 0
        %748 = vmatpush2.bf16.msra.mxu0 0
        %749 = vmatprep.subr.bf16.mxu0 0
        %750 = vmatpush2.bf16.msra.mxu0 0
        %751 = vmatprep.subr.bf16.mxu0 0
        %752 = vmatpush2.bf16.msra.mxu0 0
        %753 = vmatprep.subr.bf16.mxu0 0
        %754 = vmatpush2.bf16.msra.mxu0 0
        %755 = vmatprep.subr.bf16.mxu0 0
        %756 = vmatpush2.bf16.msra.mxu0 0
        %757 = vmatprep.subr.bf16.mxu0 0
        %758 = vmatpush2.bf16.msra.mxu0 0
        %759 = vmatprep.subr.bf16.mxu0 0
        %760 = vmatpush2.bf16.msra.mxu0 0
        %761 = vmatprep.subr.bf16.mxu0 0
        %762 = vmatpush2.bf16.msra.mxu0 0
        %763 = vmatprep.mubr.bf16.mxu0 0
        %764 = vmatmul.mubr.bf16.gmra.mxu0 %v650
        %v765 = vpop.f32.mrf.mxu0
        %v766 = vadd.f32 %v681, %v765
        %v767 = vpop.f32.mrf.mxu0
        %v768 = vpop.f32.mrf.mxu0
        %v769 = vadd.f32 %v681, %v768
        %v770 = vpop.f32.mrf.mxu0
        %771 = vmatprep.mubr.bf16.mxu0 0
        %772 = vmatmul.mubr.bf16.gmra.mxu0 %v651
        %v773 = vpop.f32.mrf.mxu0
        %v774 = vadd.f32 %v681, %v773
        %v775 = vpop.f32.mrf.mxu0
        %v776 = vpop.f32.mrf.mxu0
        %v777 = vadd.f32 %v681, %v776
        %v778 = vpop.f32.mrf.mxu0
        %779 = vmatprep.mubr.bf16.mxu0 0
        %780 = vmatmul.mubr.bf16.gmra.mxu0 %v652
        %v781 = vpop.f32.mrf.mxu0
        %v782 = vadd.f32 %v681, %v781
        %v783 = vpop.f32.mrf.mxu0
        %v784 = vpop.f32.mrf.mxu0
        %v785 = vadd.f32 %v681, %v784
        %v786 = vpop.f32.mrf.mxu0
        %787 = vmatprep.mubr.bf16.mxu0 0
        %788 = vmatmul.mubr.bf16.gmra.mxu0 %v653
        %v789 = vpop.f32.mrf.mxu0
        %v790 = vadd.f32 %v681, %v789
        %v791 = vpop.f32.mrf.mxu0
        %v792 = vpop.f32.mrf.mxu0
        %v793 = vadd.f32 %v681, %v792
        %v794 = vpop.f32.mrf.mxu0
        %795 = vmatprep.mubr.bf16.mxu0 0
        %796 = vmatmul.mubr.bf16.gmra.mxu0 %v654
        %v797 = vpop.f32.mrf.mxu0
        %v798 = vadd.f32 %v681, %v797
        %v799 = vpop.f32.mrf.mxu0
        %v800 = vpop.f32.mrf.mxu0
        %v801 = vadd.f32 %v681, %v800
        %v802 = vpop.f32.mrf.mxu0
        %803 = vmatprep.mubr.bf16.mxu0 0
        %804 = vmatmul.mubr.bf16.gmra.mxu0 %v655
        %v805 = vpop.f32.mrf.mxu0
        %v806 = vadd.f32 %v681, %v805
        %v807 = vpop.f32.mrf.mxu0
        %v808 = vpop.f32.mrf.mxu0
        %v809 = vadd.f32 %v681, %v808
        %v810 = vpop.f32.mrf.mxu0
        %811 = vmatprep.mubr.bf16.mxu0 0
        %812 = vmatmul.mubr.bf16.gmra.mxu0 %v656
        %v813 = vpop.f32.mrf.mxu0
        %v814 = vadd.f32 %v681, %v813
        %v815 = vpop.f32.mrf.mxu0
        %v816 = vpop.f32.mrf.mxu0
        %v817 = vadd.f32 %v681, %v816
        %v818 = vpop.f32.mrf.mxu0
        %819 = vmatprep.mubr.bf16.mxu0 0
        %820 = vmatmul.mubr.bf16.gmra.mxu0 %v657
        %v821 = vpop.f32.mrf.mxu0
        %v822 = vadd.f32 %v681, %v821
        %v823 = vpop.f32.mrf.mxu0
        %v824 = vpop.f32.mrf.mxu0
        %v825 = vadd.f32 %v681, %v824
        %v826 = vpop.f32.mrf.mxu0
        %827 = vdwg.mxu0
        %v828 = vmax.f32 %v766, 0.0
        %v829 = vmax.f32 %v769, 0.0
        %v830 = vmax.f32 %v774, 0.0
        %v831 = vmax.f32 %v777, 0.0
        %v832 = vmax.f32 %v782, 0.0
        %v833 = vmax.f32 %v785, 0.0
        %v834 = vmax.f32 %v790, 0.0
        %v835 = vmax.f32 %v793, 0.0
        %v836 = vmax.f32 %v798, 0.0
        %v837 = vmax.f32 %v801, 0.0
        %v838 = vmax.f32 %v806, 0.0
        %v839 = vmax.f32 %v809, 0.0
        %v840 = vmax.f32 %v814, 0.0
        %v841 = vmax.f32 %v817, 0.0
        %v842 = vmax.f32 %v822, 0.0
        %v843 = vmax.f32 %v825, 0.0
        %v844 = vpack.c.bf16 %v829, %v828
        %v845 = vpack.c.bf16 %v831, %v830
        %v846 = vpack.c.bf16 %v833, %v832
        %v847 = vpack.c.bf16 %v835, %v834
        %v848 = vpack.c.bf16 %v837, %v836
        %v849 = vpack.c.bf16 %v839, %v838
        %v850 = vpack.c.bf16 %v841, %v840
        %v851 = vpack.c.bf16 %v843, %v842
        %v852 = vld [vmem:[%s5] sm:$0x1]
        %v853 = vld [vmem:[#allocation2] sm:$0x1]
        %855 = vset.pattern.permute.xlu0 0
        %856 = vperm.xlu0 %855, %v853
        %v857 = vpop.permute.xlu0 %856
        %v859 = vlaneseq
        %v860 = vshrl.u32 %v859, 7
        %v861 = vsub.s32 0, %v860
        %v862 = vrot.slane %v857, %v861
        %863 = vmatprep.subr.bf16.mxu0 0
        %864 = vmatpush1.bf16.xpose.msra.mxu0 %v851
        %865 = vmatprep.subr.bf16.mxu0 0
        %866 = vmatpush1.bf16.xpose.msra.mxu0 %v850
        %867 = vmatprep.subr.bf16.mxu0 0
        %868 = vmatpush1.bf16.xpose.msra.mxu0 %v849
        %869 = vmatprep.subr.bf16.mxu0 0
        %870 = vmatpush1.bf16.xpose.msra.mxu0 %v848
        %871 = vmatprep.subr.bf16.mxu0 0
        %872 = vmatpush1.bf16.xpose.msra.mxu0 %v847
        %873 = vmatprep.subr.bf16.mxu0 0
        %874 = vmatpush1.bf16.xpose.msra.mxu0 %v846
        %875 = vmatprep.subr.bf16.mxu0 0
        %876 = vmatpush1.bf16.xpose.msra.mxu0 %v845
        %877 = vmatprep.subr.bf16.mxu0 0
        %878 = vmatpush1.bf16.xpose.msra.mxu0 %v844
        %879 = vmatprep.subr.bf16.mxu0 0
        %880 = vmatpush2.bf16.xpose.msra.mxu0 0
        %881 = vmatprep.subr.bf16.mxu0 0
        %882 = vmatpush2.bf16.xpose.msra.mxu0 0
        %883 = vmatprep.subr.bf16.mxu0 0
        %884 = vmatpush2.bf16.xpose.msra.mxu0 0
        %885 = vmatprep.subr.bf16.mxu0 0
        %886 = vmatpush2.bf16.xpose.msra.mxu0 0
        %887 = vmatprep.subr.bf16.mxu0 0
        %888 = vmatpush2.bf16.xpose.msra.mxu0 0
        %889 = vmatprep.subr.bf16.mxu0 0
        %890 = vmatpush2.bf16.xpose.msra.mxu0 0
        %891 = vmatprep.subr.bf16.mxu0 0
        %892 = vmatpush2.bf16.xpose.msra.mxu0 0
        %893 = vmatprep.subr.bf16.mxu0 0
        %894 = vmatpush2.bf16.xpose.msra.mxu0 0
        %895 = vmatprep.mubr.bf16.mxu0 0
        %896 = vmatmul.mubr.bf16.gmra.mxu0 %v852
        %v897 = vpop.f32.mrf.mxu0
        %v898 = vadd.f32 %v862, %v897
        %v899 = vpop.f32.mrf.mxu0
        %v900 = vpop.f32.mrf.mxu0
        %v901 = vpop.f32.mrf.mxu0
        %902 = vdwg.mxu0
        %903 = vst [vmem:[%s273] sm:$0x1] %v898
        %s904 = sand.u32 %s183, 1
        %s905 = scalar_lea.sflag [#allocation4], %s904
        %s906 = sand.u32 %s183, 1
        %s907 = scalar_lea.vmem [#allocation3], %s906
        // Predicated region
        $region49: #{fnn_forward.1} parent=47 // pred_check
          %p908 = pneg %p193
        $region50: #{fnn_forward.1} parent=47 // pred_check_branch
          %910 = sbr.rel (%p908) target = $region52
        $region51: #{fnn_forward.1} parent=47 // pred_region
          %s912 = ssub.s32 16, 16
          %913 = vsyncadd %s905, %s912
          %s914 = smul.addr %s23, 16
          %s915 = scalar_lea.hbm %s7, %s914
          %s917 = sshll.u32 %s907, 4
          %s918 = int_to_ptr.vmem [resolvable:$true] %s917
          %920 = dma.vmem_to_hbm [thread:$0]  %s918, 16, %s915, %s905
        $region52: #{fnn_forward.1} parent=47 // pred_fallthru
          _
      $region48: #{fnn_forward.1} parent=5 // pred_fallthru
        _
      %p921 = scmp.le.s32.totalorder 2, %s18
      // Predicated region
      $region53: #{fnn_forward.1} parent=5 // pred_check
        %p922 = pneg %p921
      $region54: #{fnn_forward.1} parent=5 // pred_check_branch
        %924 = sbr.rel (%p922) target = $region56
      $region55: #{fnn_forward.1} parent=5 // pred_region
        %s925 = ssub.s32 %s18, 2
        // Predicated region
        $region57: #{fnn_forward.1} parent=55 // pred_check
          %p926 = pneg %p199
        $region58: #{fnn_forward.1} parent=55 // pred_check_branch
          %928 = sbr.rel (%p926) target = $region60
        $region59: #{fnn_forward.1} parent=55 // pred_region
          %s929 = sand.u32 %s184, 1
          %s930 = scalar_lea.sflag [#allocation4], %s929
          %s931 = sand.u32 %s184, 1
          %s932 = scalar_lea.vmem [#allocation3], %s931
          %933 = dma.done %s930, 16
        $region60: #{fnn_forward.1} parent=55 // pred_fallthru
          _
      $region56: #{fnn_forward.1} parent=5 // pred_fallthru
        _
    $region6: #{fnn_forward.1} parent=1 // loop_footer
      %s22 = sadd.s32 1, %s18
    $region7: #{fnn_forward.1} parent=1 // loop_footer_branch
      %17 = sbr.rel target = $region3
    $region8: #{fnn_forward.1} parent=1 // loop_exit
      _
    %934 = vsyncpa [#allocation4], 1
    %s935 = scalar_lea.sflag [#allocation4], 1
    %936 = vsyncpa %s935, 1

</llo_original>
